<compile_context>
chip_gen: v6e
topology: v6e:2x2x1
jax: 0.10.0
libtpu: 0.0.40
codegen_flags: <defaults>
</compile_context>

<pallas_src>
import jax
import jax.numpy as jnp
from jax.experimental import pallas as pl
from jax.experimental.pallas import tpu as pltpu


def _sq_diff_partial_kernel(e_ref, d_ref, out_ref):
    """One grid step: per-lane partial sum of (e - d)^2 over a [tb, td] tile.

    e_ref/d_ref : VMEM tiles, shape (tb, td)
    out_ref     : VMEM output block, shape (1, td), f32 — this block's partials
    """
    diff = e_ref[...].astype(jnp.float32) - d_ref[...].astype(jnp.float32)
    out_ref[...] = jnp.sum(diff * diff, axis=0, keepdims=True)


def _weighted_mse_pallas(endpoints, target, weight):
    """weight * mean((endpoints - target)^2) with a Pallas streaming reduction."""
    B, D = endpoints.shape
    itemsize = max(jnp.dtype(endpoints.dtype).itemsize,
                   jnp.dtype(target.dtype).itemsize)

    # ---- tile selection -------------------------------------------------
    # ~2 MiB per input tile keeps 2 inputs x 2 pipeline buffers well under the
    # scoped VMEM limit on all of v5e / v6e / v7x, while being large enough to
    # sit near the HBM roofline (mem-bound kernel).
    target_tile_bytes = 2 << 20
    row_align = 16 if itemsize < 4 else 8          # bf16 packs 16 rows / vreg

    # Feature tile: only split D when it is 128-aligned (BlockSpec lane rule);
    # otherwise take the full row (the common embedding case anyway).
    if D % 128 == 0 and D * itemsize > target_tile_bytes:
        td = max(128, (target_tile_bytes // itemsize) // 128 * 128)
        td = min(td, D)
    else:
        td = D

    # Batch tile: biggest multiple of row_align fitting the per-tile budget.
    tb = max(row_align, (target_tile_bytes // (td * itemsize)) // row_align * row_align)
    b_aligned = pl.cdiv(B, row_align) * row_align
    tb = min(tb, b_aligned)                        # small problems -> grid=(1,1)

    num_bb = pl.cdiv(B, tb)
    num_db = pl.cdiv(D, td)
    padded_b = num_bb * tb
    if padded_b != B:
        # zero-pad both operands: padded rows give diff == 0 -> contribute 0
        endpoints = jnp.pad(endpoints, ((0, padded_b - B), (0, 0)))
        target = jnp.pad(target, ((0, padded_b - B), (0, 0)))

    # explicit scoped-VMEM budget: 2 inputs x 2 buffers x tile + output + margin
    vmem_needed = 2 * 2 * tb * td * itemsize + 2 * td * 4 + (1 << 20)
    vmem_limit = int(min(max(2 * vmem_needed, 16 << 20), 48 << 20))

    partials = pl.pallas_call(
        _sq_diff_partial_kernel,
        out_shape=jax.ShapeDtypeStruct((num_bb, D), jnp.float32),
        grid_spec=pltpu.PrefetchScalarGridSpec(
            num_scalar_prefetch=0,
            grid=(num_bb, num_db),
            in_specs=[
                pl.BlockSpec((tb, td), lambda i, j: (i, j)),
                pl.BlockSpec((tb, td), lambda i, j: (i, j)),
            ],
            out_specs=pl.BlockSpec((1, td), lambda i, j: (i, j)),
        ),
        compiler_params=pltpu.CompilerParams(
            dimension_semantics=("parallel", "parallel"),  # independent partials
            vmem_limit_bytes=vmem_limit),
    )(endpoints, target)

    # tiny final reduction + linear weighting (weight folded here, no SMEM DMA)
    return (weight / float(B * D)) * jnp.sum(partials)


class LinearWeightedLoss:
    """Concrete weight_module: weight * MSE(endpoints, data['target'])."""

    def __init__(self, weight):
        self.weight = float(weight)

    def __call__(self, endpoints, data, filtered=False):
        # `filtered` mirrors the original call signature; the MSE head treats
        # filtered / unfiltered inputs identically.
        target = data["target"]
        return _weighted_mse_pallas(endpoints, target, self.weight)


class LeadingRowsDataController:
    """Concrete data_controller: split == keep the first `split_info` rows."""

    @staticmethod
    def split(x, split_info):
        n = int(split_info)
        if isinstance(x, dict):
            return {k: v[:n] for k, v in x.items()}
        return x[:n]


class MultiLoss:
    """JAX/Pallas port of triplet_reid MultiLoss (forward-pass semantics)."""

    def __init__(self, weight_module, data_controller):
        self.weight_module = weight_module
        self.data_controller = data_controller

    def __call__(self, endpoints, data):
        data = dict(data)                       # don't mutate caller's dict
        if "split_info" in data:
            split_info = data.pop("split_info")
            filtered_endpoints = self.data_controller.split(endpoints, split_info)
            filtered_data = self.data_controller.split(data, split_info)
            return self.weight_module(filtered_endpoints, filtered_data,
                                      filtered=True)
        else:
            return self.weight_module(endpoints, data, filtered=False)


if __name__ == "__main__":
    key = jax.random.PRNGKey(0)
    k_e, k_d, k_e2, k_d2 = jax.random.split(key, 4)

    weight = 0.7
    loss_fn = MultiLoss(LinearWeightedLoss(weight), LeadingRowsDataController())

    # --- unfiltered path (no 'split_info') ---
    B, D = 16, 128                      # small synthetic embedding shapes
    endpoints = jax.random.normal(k_e, (B, D), dtype=jnp.float32)
    target = jax.random.normal(k_d, (B, D), dtype=jnp.float32)

    loss = loss_fn(endpoints, {"target": target})
    jax.block_until_ready(loss)
    ref = weight * jnp.mean((endpoints - target) ** 2)
    assert jnp.allclose(loss, ref, rtol=1e-5, atol=1e-5), (loss, ref)

    # --- filtered path ('split_info' present) ---
    split = 8
    loss_f = loss_fn(endpoints, {"target": target, "split_info": split})
    jax.block_until_ready(loss_f)
    ref_f = weight * jnp.mean((endpoints[:split] - target[:split]) ** 2)
    assert jnp.allclose(loss_f, ref_f, rtol=1e-5, atol=1e-5), (loss_f, ref_f)

    # --- ragged batch (exercises the zero-padding path) ---
    B2, D2 = 10, 256
    endpoints2 = jax.random.normal(k_e2, (B2, D2), dtype=jnp.float32)
    target2 = jax.random.normal(k_d2, (B2, D2), dtype=jnp.float32)
    loss_r = loss_fn(endpoints2, {"target": target2})
    jax.block_until_ready(loss_r)
    ref_r = weight * jnp.mean((endpoints2 - target2) ** 2)
    assert jnp.allclose(loss_r, ref_r, rtol=1e-5, atol=1e-5), (loss_r, ref_r)

    print("KERNEL_OK")
</pallas_src>

<mosaic_0001>
module attributes {stable_mosaic.version = 11 : i64} {
  func.func @_sq_diff_partial_kernel(%arg0: i32, %arg1: i32, %arg2: memref<16x128xf32, #tpu.memory_space<vmem>>, %arg3: memref<16x128xf32, #tpu.memory_space<vmem>>, %arg4: memref<1x128xf32, #tpu.memory_space<vmem>>) attributes {dimension_semantics = [#tpu.dimension_semantics<parallel>, #tpu.dimension_semantics<parallel>], iteration_bounds = array<i64: 1, 1>, scalar_prefetch = 0 : i64, scratch_operands = 0 : i64, tpu.core_type = #tpu.core_type<tc>, window_params = [{transform_indices = @transform_0, window_bounds = array<i64: 16, 128>}, {transform_indices = @transform_1, window_bounds = array<i64: 16, 128>}, {transform_indices = @transform_2, window_bounds = array<i64: 1, 128>}]} {
    %c0 = arith.constant 0 : index
    %c0_0 = arith.constant 0 : index
    %0 = vector.load %arg2[%c0, %c0_0] : memref<16x128xf32, #tpu.memory_space<vmem>>, vector<16x128xf32>
    %c0_1 = arith.constant 0 : index
    %c0_2 = arith.constant 0 : index
    %1 = vector.load %arg3[%c0_1, %c0_2] : memref<16x128xf32, #tpu.memory_space<vmem>>, vector<16x128xf32>
    %2 = arith.subf %0, %1 : vector<16x128xf32>
    %3 = arith.mulf %2, %2 : vector<16x128xf32>
    %cst = arith.constant dense<0.000000e+00> : vector<128xf32>
    %4 = vector.multi_reduction <add>, %3, %cst [0] : vector<16x128xf32> to vector<128xf32>
    %5 = vector.shape_cast %4 : vector<128xf32> to vector<1x128xf32>
    %c0_3 = arith.constant 0 : index
    %c0_4 = arith.constant 0 : index
    %6 = vector.load %arg4[%c0_3, %c0_4] : memref<1x128xf32, #tpu.memory_space<vmem>>, vector<1x128xf32>
    tpu.vector_store %arg4[%c0_3, %c0_4], %5 {strides = array<i32>} : memref<1x128xf32, #tpu.memory_space<vmem>>, vector<1x128xf32>,
    return
  }
  func.func @transform_0(%arg0: i32, %arg1: i32) -> (i32, i32) {
    %c0_i32 = arith.constant 0 : i32
    return %arg0, %arg1 : i32, i32
  }
  func.func @transform_1(%arg0: i32, %arg1: i32) -> (i32, i32) {
    %c0_i32 = arith.constant 0 : i32
    return %arg0, %arg1 : i32, i32
  }
  func.func @transform_2(%arg0: i32, %arg1: i32) -> (i32, i32) {
    %c0_i32 = arith.constant 0 : i32
    return %arg0, %arg1 : i32, i32
  }
}

</mosaic_0001>

<llo_original>
// kernel: tpu_custom_call.1
$region0: #{tpu_custom_call.1}
  #allocation0 [shape = 'u32[]', space=smem, size = 0x4, offset = 0x4, fixed_abs, tag = 'smem constant byte address 0x4 - core index']
  #allocation1 [shape = 'u32[144,128]{1,0:T(1,128)}', space=vmem, size = 0x12000, scoped, tag = 'internal scratch']
  %s0 = inlined_call_operand.hbm [shape: f32[16,128], index: 0, kind: input, shape index: {}]
  %s1 = inlined_call_operand.hbm [shape: f32[16,128], index: 1, kind: input, shape index: {}]
  %s2 = inlined_call_operand.hbm [shape: f32[1,128], index: 2, kind: output, shape index: {}]
  %s3 = sld [smem:[#allocation0]]
  $region26: #{tpu_custom_call.1} parent=0
    _
  %s5 = ssub.s32 1, %s3
  %s6 = scalar_select 0, %s5, %s3
  $region1: #{tpu_custom_call.1} parent=0
    #allocation2 [shape = 'u8[8192]{0}', space=vmem, size = 0x2000, scoped, tag = 'input window, operand 0, single buffered']
    #allocation3 [shape = 's32[1]{0}', space=sflag, size = 0x4, scoped, tag = 'scoped memory for tpu_custom_call.1']
    #allocation4 [shape = 's32[1]{0}', space=sflag, size = 0x4, scoped, tag = 'scoped memory for tpu_custom_call.1']
    #allocation5 [shape = 'u8[8192]{0}', space=vmem, size = 0x2000, scoped, tag = 'input window, operand 1, single buffered']
    #allocation6 [shape = 's32[1]{0}', space=sflag, size = 0x4, scoped, tag = 'scoped memory for tpu_custom_call.1']
    #allocation7 [shape = 'u8[512]{0}', space=vmem, size = 0x400, scoped, tag = 'output window, operand 0, single buffered']
    %7 = vsyncpa [#allocation3], 0
    %8 = vsyncpa [#allocation6], 0
    %9 = vsyncpa [#allocation4], 0
    // Predicated region
    $region2: #{tpu_custom_call.1} parent=1 // pred_check
      _
    $region3: #{tpu_custom_call.1} parent=1 // pred_check_branch
      %11 = sbr.rel (0) target = $region5
    $region4: #{tpu_custom_call.1} parent=1 // pred_region
      %s13 = ssub.s32 256, 256
      %14 = vsyncadd [#allocation3], %s13
      %s15 = sshll.u32 [#allocation2], 4
      %s16 = int_to_ptr.vmem [resolvable:$true] %s15
      %21 = dma.hbm_to_vmem [thread:$0]  %s0, 256, %s16, [#allocation3], 128, 128, 8
    $region5: #{tpu_custom_call.1} parent=1 // pred_fallthru
      _
    // Predicated region
    $region6: #{tpu_custom_call.1} parent=1 // pred_check
      _
    $region7: #{tpu_custom_call.1} parent=1 // pred_check_branch
      %23 = sbr.rel (0) target = $region9
    $region8: #{tpu_custom_call.1} parent=1 // pred_region
      %s25 = ssub.s32 256, 256
      %26 = vsyncadd [#allocation6], %s25
      %s27 = sshll.u32 [#allocation5], 4
      %s28 = int_to_ptr.vmem [resolvable:$true] %s27
      %33 = dma.hbm_to_vmem [thread:$0]  %s1, 256, %s28, [#allocation6], 128, 128, 8
    $region9: #{tpu_custom_call.1} parent=1 // pred_fallthru
      _
    // Predicated region
    $region10: #{tpu_custom_call.1} parent=1 // pred_check
      _
    $region11: #{tpu_custom_call.1} parent=1 // pred_check_branch
      %35 = sbr.rel (0) target = $region13
    $region12: #{tpu_custom_call.1} parent=1 // pred_region
      %36 = dma.done [#allocation3], 256
    $region13: #{tpu_custom_call.1} parent=1 // pred_fallthru
      _
    // Predicated region
    $region14: #{tpu_custom_call.1} parent=1 // pred_check
      _
    $region15: #{tpu_custom_call.1} parent=1 // pred_check_branch
      %38 = sbr.rel (0) target = $region17
    $region16: #{tpu_custom_call.1} parent=1 // pred_region
      %39 = dma.done [#allocation6], 256
    $region17: #{tpu_custom_call.1} parent=1 // pred_fallthru
      _
    %v40 = vld [vmem:[#allocation2] sm:$0xff]
    %v41 = vld [vmem:[#allocation2 + $0x8] sm:$0xff]
    %v42 = vld [vmem:[#allocation5] sm:$0xff]
    %v43 = vld [vmem:[#allocation5 + $0x8] sm:$0xff]
    %v44 = vsub.f32 %v40, %v42
    %v45 = vsub.f32 %v41, %v43
    %v46 = vmul.f32 %v44, %v44
    %v47 = vmul.f32 %v45, %v45
    %v48 = vadd.f32 %v46, %v47
    %v49 = vrot.slane %v48, 4
    %v50 = vadd.f32 %v48, %v49
    %v51 = vrot.slane %v50, 2
    %v52 = vadd.f32 %v50, %v51
    %v53 = vrot.slane %v52, 1
    %v54 = vadd.f32 %v52, %v53
    %55 = vst [vmem:[#allocation7] sm:$0x1] %v54
    // Predicated region
    $region18: #{tpu_custom_call.1} parent=1 // pred_check
      _
    $region19: #{tpu_custom_call.1} parent=1 // pred_check_branch
      %57 = sbr.rel (0) target = $region21
    $region20: #{tpu_custom_call.1} parent=1 // pred_region
      %s59 = ssub.s32 16, 16
      %60 = vsyncadd [#allocation4], %s59
      %s62 = sshll.u32 [#allocation7], 4
      %s63 = int_to_ptr.vmem [resolvable:$true] %s62
      %65 = dma.vmem_to_hbm [thread:$0]  %s63, 16, %s2, [#allocation4]
    $region21: #{tpu_custom_call.1} parent=1 // pred_fallthru
      _
    // Predicated region
    $region22: #{tpu_custom_call.1} parent=1 // pred_check
      _
    $region23: #{tpu_custom_call.1} parent=1 // pred_check_branch
      %67 = sbr.rel (0) target = $region25
    $region24: #{tpu_custom_call.1} parent=1 // pred_region
      %68 = dma.done [#allocation4], 16
    $region25: #{tpu_custom_call.1} parent=1 // pred_fallthru
      _
    %69 = vsyncpa [#allocation3], 1
    %70 = vsyncpa [#allocation6], 1
    %71 = vsyncpa [#allocation4], 1

</llo_original>
